<compile_context>
chip_gen: v5e
topology: v5e:2x2
jax: 0.10.0
libtpu: 0.0.40
codegen_flags: <defaults>
</compile_context>

<pallas_src>
import jax
import jax.numpy as jnp
from jax.experimental import pallas as pl
from jax.experimental.pallas import tpu as pltpu


def _stgcn_block_kernel(xt_ref, at_ref, w1t_ref, w2t_ref, sh_ref, out_ref):
    """One batch element, transposed (V, C*T) layout.

    xt_ref : (1, V, c_in*T)    VMEM   x^T (channel-time stacked columns)
    at_ref : (V, V)            VMEM   A^T
    w1t_ref: (c_in*T, c_out*T) VMEM   (BN-scaled tcn*gcn folded weight)^T
    w2t_ref: (c_in*T, c_out*T) VMEM   (residual 1x1 conv kron I_T)^T
    sh_ref : (1, c_out*T)      VMEM   folded biases + BN shift (edge-aware)
    out_ref: (1, V, c_out*T)   VMEM
    """
    xt = xt_ref[0]                                              # (V, Ci*T)
    # graph conv:  Y^T = A^T @ X^T
    yt = jnp.dot(at_ref[...], xt, preferred_element_type=jnp.float32)
    # folded gcn-1x1 + temporal conv + BN scale  |  residual 1x1  |  biases
    lin = (jnp.dot(yt, w1t_ref[...], preferred_element_type=jnp.float32)
           + jnp.dot(xt, w2t_ref[...], preferred_element_type=jnp.float32)
           + sh_ref[...])                                       # (V, Co*T)
    out_ref[0] = jnp.maximum(lin, 0.0)                          # ReLU, lane-dense store


def stgcn_block(x, A, wg, bg, wt, bt, bn_gamma, bn_beta, bn_mean, bn_var,
                wd=None, bd=None, eps=1e-5):
    n, c_in, t, v = x.shape
    c_out = wg.shape[0]
    ksize = wt.shape[2]
    pad = (ksize - 1) // 2
    f32 = jnp.float32
    cit, cot = c_in * t, c_out * t

    # ---- fold every linear stage into two (Co*T, Ci*T) matrices + a shift ----
    # Eval-mode BatchNorm folded into per-channel scale / shift.
    # TODO(synk): PyTorch BatchNorm2d in training mode uses batch statistics;
    #             only eval-mode running-stat normalization is implemented.
    bns = bn_gamma / jnp.sqrt(bn_var + eps)
    bnb = bn_beta - bn_mean * bns

    eye_t = jnp.eye(t, dtype=f32)
    # Banded matrix of the (ksize,1) temporal conv with zero padding along T:
    #   band[p*T + tt, o*T + tt'] = wt[p, o, k]  where tt' = tt + k - pad (valid)
    band = sum(jnp.kron(wt[:, :, k, 0].astype(f32),
                        jnp.eye(t, k=k - pad, dtype=f32))
               for k in range(ksize))
    gcn = jnp.kron(wg.astype(f32), eye_t)                       # (Co*T, Ci*T)

    bns_v = jnp.repeat(bns.astype(f32), t)                      # (Co*T,)
    bnb_v = jnp.repeat(bnb.astype(f32), t)
    bg_v = jnp.repeat(bg.astype(f32), t)
    bt_v = jnp.repeat(bt.astype(f32), t)

    if wd is None:                                              # identity residual
        assert c_in == c_out
        w_res = jnp.eye(cot, dtype=f32)
        bd_v = jnp.zeros((cot,), f32)
    else:
        w_res = jnp.kron(wd.astype(f32), eye_t)                 # (Co*T, Ci*T)
        bd_v = jnp.repeat(bd.astype(f32), t)

    w1 = bns_v[:, None] * (band @ gcn)                          # BN scale folded in
    shift = bns_v * (band @ bg_v + bt_v) + bnb_v + bd_v         # edge-aware biases

    # ---- lane-dense transposed layouts for the kernel ----
    x_t = x.astype(f32).transpose(0, 3, 1, 2).reshape(n, v, cit)   # X^T per batch
    a_t = A.astype(f32).T
    w1_t = w1.T                                                 # (Ci*T, Co*T)
    w2_t = w_res.T
    sh = shift.reshape(1, cot)

    flops = 2 * n * (v * v * cit + 2 * v * cit * cot)
    bytes_accessed = 4 * (x.size + n * v * cot + v * v + 2 * cit * cot + cot)

    out_t = pl.pallas_call(
        _stgcn_block_kernel,
        out_shape=jax.ShapeDtypeStruct((n, v, cot), f32),
        grid=(n,),
        in_specs=[
            pl.BlockSpec((1, v, cit), lambda i: (i, 0, 0)),     # x^T
            pl.BlockSpec((v, v), lambda i: (0, 0)),             # A^T
            pl.BlockSpec((cit, cot), lambda i: (0, 0)),         # W1^T
            pl.BlockSpec((cit, cot), lambda i: (0, 0)),         # W2^T
            pl.BlockSpec((1, cot), lambda i: (0, 0)),           # shift
        ],
        out_specs=pl.BlockSpec((1, v, cot), lambda i: (i, 0, 0)),
        compiler_params=pltpu.CompilerParams(
            dimension_semantics=("parallel",)),
        cost_estimate=pl.CostEstimate(flops=int(flops), transcendentals=0,
                                      bytes_accessed=int(bytes_accessed)),
    )(x_t, a_t, w1_t, w2_t, sh)

    # (n, V, Co*T) -> (n, Co, T, V)
    return out_t.reshape(n, v, c_out, t).transpose(0, 2, 3, 1)


def stgcn_block_ref(x, A, wg, bg, wt, bt, gamma, beta, mean, var, wd, bd,
                    eps=1e-5):
    """Pure-JAX reference mirroring the PyTorch forward (eval-mode BN)."""
    n, c_in, t, v = x.shape
    c_out = wg.shape[0]
    ksize = wt.shape[2]
    pad = (ksize - 1) // 2
    y = jnp.einsum('nctv,vw->nctw', x, A)
    z = jnp.einsum('oc,nctv->notv', wg, y) + bg[None, :, None, None]
    zp = jnp.pad(z, ((0, 0), (0, 0), (pad, pad), (0, 0)))
    u = jnp.zeros((n, c_out, t, v), jnp.float32)
    for k in range(ksize):
        u = u + jnp.einsum('oc,nctv->notv', wt[:, :, k, 0], zp[:, :, k:k + t, :])
    u = u + bt[None, :, None, None]
    u = (u - mean[None, :, None, None]) / jnp.sqrt(var[None, :, None, None] + eps)
    u = u * gamma[None, :, None, None] + beta[None, :, None, None]
    if wd is None:
        res = x + bd * 0.0 if bd is not None else x
    else:
        res = jnp.einsum('oc,nctv->notv', wd, x) + bd[None, :, None, None]
    return jnp.maximum(u + res, 0.0)


if __name__ == "__main__":
    N, C_IN, C_OUT, T, V, K = 2, 4, 8, 16, 16, 9

    key = jax.random.PRNGKey(0)
    ks = jax.random.split(key, 8)

    x = jax.random.normal(ks[0], (N, C_IN, T, V), jnp.float32)

    # Fixed adjacency (column-normalized random graph), deterministic.
    A_raw = jax.random.uniform(ks[1], (V, V), jnp.float32)
    A = A_raw / jnp.sum(A_raw, axis=0, keepdims=True)

    # Deterministic synthetic parameters (shapes follow the module __init__).
    wg = 0.3 * jax.random.normal(ks[2], (C_OUT, C_IN), jnp.float32)         # gcn.conv
    bg = 0.1 * jax.random.normal(ks[3], (C_OUT,), jnp.float32)
    wt = 0.2 * jax.random.normal(ks[4], (C_OUT, C_OUT, K, 1), jnp.float32)  # tcn conv
    bt = 0.1 * jax.random.normal(ks[5], (C_OUT,), jnp.float32)
    wd = 0.3 * jax.random.normal(ks[6], (C_OUT, C_IN), jnp.float32)         # down conv
    bd = 0.1 * jax.random.normal(ks[7], (C_OUT,), jnp.float32)
    # BatchNorm2d at default init (gamma=1, beta=0, running stats 0/1).
    gamma = jnp.ones((C_OUT,), jnp.float32)
    beta = jnp.zeros((C_OUT,), jnp.float32)
    rmean = jnp.zeros((C_OUT,), jnp.float32)
    rvar = jnp.ones((C_OUT,), jnp.float32)

    out = stgcn_block(x, A, wg, bg, wt, bt, gamma, beta, rmean, rvar, wd, bd)
    out = jax.block_until_ready(out)

    ref = stgcn_block_ref(x, A, wg, bg, wt, bt, gamma, beta, rmean, rvar, wd, bd)
    assert out.shape == (N, C_OUT, T, V)
    err = float(jnp.max(jnp.abs(out - ref)))
    assert jnp.allclose(out, ref, atol=1e-4, rtol=1e-4), f"max abs err={err}"

    print("KERNEL_OK")
</pallas_src>

<mosaic_0001>
module attributes {stable_mosaic.version = 11 : i64} {
  func.func @_stgcn_block_kernel(%arg0: i32, %arg1: memref<1x16x64xf32, #tpu.memory_space<vmem>>, %arg2: memref<16x16xf32, #tpu.memory_space<vmem>>, %arg3: memref<64x128xf32, #tpu.memory_space<vmem>>, %arg4: memref<64x128xf32, #tpu.memory_space<vmem>>, %arg5: memref<1x128xf32, #tpu.memory_space<vmem>>, %arg6: memref<1x16x128xf32, #tpu.memory_space<vmem>>) attributes {dimension_semantics = [#tpu.dimension_semantics<parallel>], iteration_bounds = array<i64: 2>, scalar_prefetch = 0 : i64, scratch_operands = 0 : i64, tpu.core_type = #tpu.core_type<tc>, window_params = [{transform_indices = @transform_0, window_bounds = array<i64: 1, 16, 64>}, {pipeline_mode = #tpu.pipeline_mode<synchronous>, transform_indices = @transform_1, window_bounds = array<i64: 16, 16>}, {pipeline_mode = #tpu.pipeline_mode<synchronous>, transform_indices = @transform_2, window_bounds = array<i64: 64, 128>}, {pipeline_mode = #tpu.pipeline_mode<synchronous>, transform_indices = @transform_3, window_bounds = array<i64: 64, 128>}, {pipeline_mode = #tpu.pipeline_mode<synchronous>, transform_indices = @transform_4, window_bounds = array<i64: 1, 128>}, {transform_indices = @transform_5, window_bounds = array<i64: 1, 16, 128>}]} {
    %c0 = arith.constant 0 : index
    %c0_0 = arith.constant 0 : index
    %c0_1 = arith.constant 0 : index
    %0 = vector.load %arg1[%c0, %c0_0, %c0_1] : memref<1x16x64xf32, #tpu.memory_space<vmem>>, vector<1x16x64xf32>
    %1 = vector.shape_cast %0 : vector<1x16x64xf32> to vector<16x64xf32>
    %c0_2 = arith.constant 0 : index
    %c0_3 = arith.constant 0 : index
    %2 = vector.load %arg2[%c0_2, %c0_3] : memref<16x16xf32, #tpu.memory_space<vmem>>, vector<16x16xf32>
    %cst = arith.constant dense<0.000000e+00> : vector<16x64xf32>
    %3 = tpu.matmul %2, %1, %cst {dimension_numbers = #tpu.dot_dimension_numbers<[1], [0], [0], [1], [0, 0, 1, 1], [], []>} : vector<16x16xf32>, vector<16x64xf32>, vector<16x64xf32> -> vector<16x64xf32>
    %c0_4 = arith.constant 0 : index
    %c0_5 = arith.constant 0 : index
    %4 = vector.load %arg3[%c0_4, %c0_5] : memref<64x128xf32, #tpu.memory_space<vmem>>, vector<64x128xf32>
    %cst_6 = arith.constant dense<0.000000e+00> : vector<16x128xf32>
    %5 = tpu.matmul %3, %4, %cst_6 {dimension_numbers = #tpu.dot_dimension_numbers<[1], [0], [0], [1], [0, 0, 1, 1], [], []>} : vector<16x64xf32>, vector<64x128xf32>, vector<16x128xf32> -> vector<16x128xf32>
    %c0_7 = arith.constant 0 : index
    %c0_8 = arith.constant 0 : index
    %6 = vector.load %arg4[%c0_7, %c0_8] : memref<64x128xf32, #tpu.memory_space<vmem>>, vector<64x128xf32>
    %cst_9 = arith.constant dense<0.000000e+00> : vector<16x128xf32>
    %7 = tpu.matmul %1, %6, %cst_9 {dimension_numbers = #tpu.dot_dimension_numbers<[1], [0], [0], [1], [0, 0, 1, 1], [], []>} : vector<16x64xf32>, vector<64x128xf32>, vector<16x128xf32> -> vector<16x128xf32>
    %8 = arith.addf %5, %7 : vector<16x128xf32>
    %c0_10 = arith.constant 0 : index
    %c0_11 = arith.constant 0 : index
    %9 = vector.load %arg5[%c0_10, %c0_11] : memref<1x128xf32, #tpu.memory_space<vmem>>, vector<1x128xf32>
    %10 = vector.broadcast %9 : vector<1x128xf32> to vector<16x128xf32>
    %11 = arith.addf %8, %10 : vector<16x128xf32>
    %cst_12 = arith.constant 0.000000e+00 : f32
    %12 = vector.broadcast %cst_12 : f32 to vector<16x128xf32>
    %13 = arith.maximumf %11, %12 : vector<16x128xf32>
    %c0_13 = arith.constant 0 : index
    %c0_14 = arith.constant 0 : index
    %c0_15 = arith.constant 0 : index
    %14 = vector.load %arg6[%c0_13, %c0_14, %c0_15] : memref<1x16x128xf32, #tpu.memory_space<vmem>>, vector<1x16x128xf32>
    %15 = vector.shape_cast %14 : vector<1x16x128xf32> to vector<16x128xf32>
    %16 = vector.shape_cast %13 : vector<16x128xf32> to vector<1x16x128xf32>
    tpu.vector_store %arg6[%c0_13, %c0_14, %c0_15], %16 {strides = array<i32>} : memref<1x16x128xf32, #tpu.memory_space<vmem>>, vector<1x16x128xf32>,
    return
  }
  func.func @transform_0(%arg0: i32) -> (i32, i32, i32) {
    %c0_i32 = arith.constant 0 : i32
    %c0_i32_0 = arith.constant 0 : i32
    %c0_i32_1 = arith.constant 0 : i32
    return %arg0, %c0_i32, %c0_i32_0 : i32, i32, i32
  }
  func.func @transform_1(%arg0: i32) -> (i32, i32) {
    %c0_i32 = arith.constant 0 : i32
    %c0_i32_0 = arith.constant 0 : i32
    %c0_i32_1 = arith.constant 0 : i32
    return %c0_i32, %c0_i32_0 : i32, i32
  }
  func.func @transform_2(%arg0: i32) -> (i32, i32) {
    %c0_i32 = arith.constant 0 : i32
    %c0_i32_0 = arith.constant 0 : i32
    %c0_i32_1 = arith.constant 0 : i32
    return %c0_i32, %c0_i32_0 : i32, i32
  }
  func.func @transform_3(%arg0: i32) -> (i32, i32) {
    %c0_i32 = arith.constant 0 : i32
    %c0_i32_0 = arith.constant 0 : i32
    %c0_i32_1 = arith.constant 0 : i32
    return %c0_i32, %c0_i32_0 : i32, i32
  }
  func.func @transform_4(%arg0: i32) -> (i32, i32) {
    %c0_i32 = arith.constant 0 : i32
    %c0_i32_0 = arith.constant 0 : i32
    %c0_i32_1 = arith.constant 0 : i32
    return %c0_i32, %c0_i32_0 : i32, i32
  }
  func.func @transform_5(%arg0: i32) -> (i32, i32, i32) {
    %c0_i32 = arith.constant 0 : i32
    %c0_i32_0 = arith.constant 0 : i32
    %c0_i32_1 = arith.constant 0 : i32
    return %arg0, %c0_i32, %c0_i32_0 : i32, i32, i32
  }
}

</mosaic_0001>

<llo_original>
// kernel: tpu_custom_call.1
$region0: #{tpu_custom_call.1}
  #allocation0 [shape = 'u32[]', space=smem, size = 0x4, offset = 0x4, fixed_abs, tag = 'smem constant byte address 0x4 - core index']
  #allocation1 [shape = 'u32[72,128]{1,0:T(1,128)}', space=vmem, size = 0x9000, scoped, tag = 'internal scratch']
  %s0 = inlined_call_operand.hbm [shape: f32[2,16,64], index: 0, kind: input, shape index: {}]
  %s1 = inlined_call_operand.hbm [shape: f32[16,16], index: 1, kind: input, shape index: {}]
  %s2 = inlined_call_operand.hbm [shape: f32[64,128], index: 2, kind: input, shape index: {}]
  %s3 = inlined_call_operand.hbm [shape: f32[64,128], index: 3, kind: input, shape index: {}]
  %s4 = inlined_call_operand.vmem [shape: f32[1,128], index: 4, kind: input, shape index: {}]
  %s5 = inlined_call_operand.hbm [shape: f32[2,16,128], index: 5, kind: output, shape index: {}]
  %s6 = sld [smem:[#allocation0]]
  $region69: #{tpu_custom_call.1} parent=0
    _
  %s8 = ssub.s32 1, %s6
  %s9 = scalar_select 0, %s8, %s6
  $region1: #{tpu_custom_call.1} parent=0
    #allocation2 [shape = 'u8[16384]{0}', space=vmem, size = 0x4000, scoped, tag = 'input window, operand 0']
    #allocation3 [shape = 's32[2]{0}', space=sflag, size = 0x8, scoped, tag = 'scoped memory for tpu_custom_call.1']
    #allocation4 [shape = 's32[2]{0}', space=sflag, size = 0x8, scoped, tag = 'scoped memory for tpu_custom_call.1']
    #allocation5 [shape = 'u8[8192]{0}', space=vmem, size = 0x2000, scoped, tag = 'input window, operand 1, single buffered']
    #allocation6 [shape = 's32[1]{0}', space=sflag, size = 0x4, scoped, tag = 'scoped memory for tpu_custom_call.1']
    #allocation7 [shape = 'u8[32768]{0}', space=vmem, size = 0x8000, scoped, tag = 'input window, operand 2, single buffered']
    #allocation8 [shape = 'u8[32768]{0}', space=vmem, size = 0x8000, scoped, tag = 'input window, operand 3, single buffered']
    #allocation9 [shape = 's32[1]{0}', space=sflag, size = 0x4, scoped, tag = 'scoped memory for tpu_custom_call.1']
    #allocation10 [shape = 'u8[16384]{0}', space=vmem, size = 0x4000, scoped, tag = 'output window, operand 0']
    %10 = vsyncpa [#allocation3], 0
    %s11 = scalar_lea.sflag [#allocation3], 1
    %12 = vsyncpa %s11, 0
    %13 = vsyncpa [#allocation6], 0
    %14 = vsyncpa [#allocation9], 0
    %15 = vsyncpa [#allocation4], 0
    %s16 = scalar_lea.sflag [#allocation4], 1
    %17 = vsyncpa %s16, 0
    loop: start=0, step=1, limit=4
    $region2: #{tpu_custom_call.1} parent=1 // loop_pre_header
      _
    $region3: #{tpu_custom_call.1} parent=1 // loop_header
      %s19 = sphi 0, %s23
      %p20 = scmp.ge.s32.totalorder %s19, 4
      %s29 = sphi 0, %s31
      %s32 = sphi 0, %s29
      %s33 = sphi 0, %s32
      %s49 = sphi 0, %s33
      %s53 = sphi 0, %s53
      %s55 = sphi 0, %s53
      %s56 = sphi 0, %s55
      %s70 = sphi 0, %s56
      %s74 = sphi 0, %s74
      %s76 = sphi 0, %s74
      %s77 = sphi 0, %s76
      %s91 = sphi 0, %s77
      %s95 = sphi 0, %s95
      %s97 = sphi 0, %s95
      %s98 = sphi 0, %s97
      %s112 = sphi 0, %s98
      %s116 = sphi 0, %s116
      %s118 = sphi 0, %s116
      %s119 = sphi 0, %s118
      %s133 = sphi 0, %s119
      %s139 = sphi 0, %s141
      %s142 = sphi 0, %s139
      %s143 = sphi 0, %s142
      %s159 = sphi 0, %s143
    $region4: #{tpu_custom_call.1} parent=1 // loop_header_branch
      %22 = sbr.rel (%p20) target = $region8
    $region5: #{tpu_custom_call.1} parent=1 // loop_body
      %s24 = ssub.s32 %s19, 1
      %s25 = ssub.s32 %s19, 2
      %s26 = sadd.s32 %s19, 1
      %s27 = ssub.s32 %s19, %s26
      %p28 = scmp.eq.s32.totalorder %s27, 0
      %s30 = sadd.s32 %s29, 1
      %s31 = scalar_select %p28, %s29, %s30
      %p34 = pneg %p28
      %p35 = scmp.eq.s32.totalorder %s19, 1
      %p36 = por %p34, %p35
      %p37 = scmp.ne.s32.totalorder %s29, %s32
      %p38 = scmp.eq.s32.totalorder %s19, 0
      %p39 = por %p37, %p38
      %p40 = scmp.ne.s32.totalorder %s29, %s32
      %p41 = scmp.eq.s32.totalorder %s24, 1
      %p42 = por %p40, %p41
      %p43 = scmp.ne.s32.totalorder %s32, %s33
      %p44 = scmp.eq.s32.totalorder %s24, 0
      %p45 = por %p43, %p44
      %p46 = scmp.ne.s32.totalorder %s32, %s33
      %p47 = scmp.eq.s32.totalorder %s25, 1
      %p48 = por %p46, %p47
      %p50 = scmp.ne.s32.totalorder %s33, %s49
      %p51 = scmp.eq.s32.totalorder %s25, 0
      %p52 = por %p50, %p51
      %s54 = sadd.s32 %s53, 1
      %p57 = scmp.eq.s32.totalorder %s19, 1
      %p58 = scmp.ne.s32.totalorder %s53, %s55
      %p59 = scmp.eq.s32.totalorder %s19, 0
      %p60 = por %p58, %p59
      %p61 = scmp.ne.s32.totalorder %s53, %s55
      %p62 = scmp.eq.s32.totalorder %s24, 1
      %p63 = por %p61, %p62
      %p64 = scmp.ne.s32.totalorder %s55, %s56
      %p65 = scmp.eq.s32.totalorder %s24, 0
      %p66 = por %p64, %p65
      %p67 = scmp.ne.s32.totalorder %s55, %s56
      %p68 = scmp.eq.s32.totalorder %s25, 1
      %p69 = por %p67, %p68
      %p71 = scmp.ne.s32.totalorder %s56, %s70
      %p72 = scmp.eq.s32.totalorder %s25, 0
      %p73 = por %p71, %p72
      %s75 = sadd.s32 %s74, 1
      %p78 = scmp.eq.s32.totalorder %s19, 1
      %p79 = scmp.ne.s32.totalorder %s74, %s76
      %p80 = scmp.eq.s32.totalorder %s19, 0
      %p81 = por %p79, %p80
      %p82 = scmp.ne.s32.totalorder %s74, %s76
      %p83 = scmp.eq.s32.totalorder %s24, 1
      %p84 = por %p82, %p83
      %p85 = scmp.ne.s32.totalorder %s76, %s77
      %p86 = scmp.eq.s32.totalorder %s24, 0
      %p87 = por %p85, %p86
      %p88 = scmp.ne.s32.totalorder %s76, %s77
      %p89 = scmp.eq.s32.totalorder %s25, 1
      %p90 = por %p88, %p89
      %p92 = scmp.ne.s32.totalorder %s77, %s91
      %p93 = scmp.eq.s32.totalorder %s25, 0
      %p94 = por %p92, %p93
      %s96 = sadd.s32 %s95, 1
      %p99 = scmp.eq.s32.totalorder %s19, 1
      %p100 = scmp.ne.s32.totalorder %s95, %s97
      %p101 = scmp.eq.s32.totalorder %s19, 0
      %p102 = por %p100, %p101
      %p103 = scmp.ne.s32.totalorder %s95, %s97
      %p104 = scmp.eq.s32.totalorder %s24, 1
      %p105 = por %p103, %p104
      %p106 = scmp.ne.s32.totalorder %s97, %s98
      %p107 = scmp.eq.s32.totalorder %s24, 0
      %p108 = por %p106, %p107
      %p109 = scmp.ne.s32.totalorder %s97, %s98
      %p110 = scmp.eq.s32.totalorder %s25, 1
      %p111 = por %p109, %p110
      %p113 = scmp.ne.s32.totalorder %s98, %s112
      %p114 = scmp.eq.s32.totalorder %s25, 0
      %p115 = por %p113, %p114
      %s117 = sadd.s32 %s116, 1
      %p120 = scmp.eq.s32.totalorder %s19, 1
      %p121 = scmp.ne.s32.totalorder %s116, %s118
      %p122 = scmp.eq.s32.totalorder %s19, 0
      %p123 = por %p121, %p122
      %p124 = scmp.ne.s32.totalorder %s116, %s118
      %p125 = scmp.eq.s32.totalorder %s24, 1
      %p126 = por %p124, %p125
      %p127 = scmp.ne.s32.totalorder %s118, %s119
      %p128 = scmp.eq.s32.totalorder %s24, 0
      %p129 = por %p127, %p128
      %p130 = scmp.ne.s32.totalorder %s118, %s119
      %p131 = scmp.eq.s32.totalorder %s25, 1
      %p132 = por %p130, %p131
      %p134 = scmp.ne.s32.totalorder %s119, %s133
      %p135 = scmp.eq.s32.totalorder %s25, 0
      %p136 = por %p134, %p135
      %s137 = ssub.s32 %s19, %s26
      %p138 = scmp.eq.s32.totalorder %s137, 0
      %s140 = sadd.s32 %s139, 1
      %s141 = scalar_select %p138, %s139, %s140
      %p144 = pneg %p138
      %p145 = scmp.eq.s32.totalorder %s19, 1
      %p146 = por %p144, %p145
      %p147 = scmp.ne.s32.totalorder %s139, %s142
      %p148 = scmp.eq.s32.totalorder %s19, 0
      %p149 = por %p147, %p148
      %p150 = scmp.ne.s32.totalorder %s139, %s142
      %p151 = scmp.eq.s32.totalorder %s24, 1
      %p152 = por %p150, %p151
      %p153 = scmp.ne.s32.totalorder %s142, %s143
      %p154 = scmp.eq.s32.totalorder %s24, 0
      %p155 = por %p153, %p154
      %p156 = scmp.ne.s32.totalorder %s142, %s143
      %p157 = scmp.eq.s32.totalorder %s25, 1
      %p158 = por %p156, %p157
      %p160 = scmp.ne.s32.totalorder %s143, %s159
      %p161 = scmp.eq.s32.totalorder %s25, 0
      %p162 = por %p160, %p161
      %p163 = scmp.le.s32.totalorder 1, %s19
      %p164 = scmp.lt.s32.totalorder %s19, 3
      %p165 = pnand %p163, %p164
      %p166 = pneg %p165
      // Predicated region
      $region9: #{tpu_custom_call.1} parent=5 // pred_check
        _
      $region10: #{tpu_custom_call.1} parent=5 // pred_check_branch
        %168 = sbr.rel (%p165) target = $region12
      $region11: #{tpu_custom_call.1} parent=5 // pred_region
        %s169 = ssub.s32 %s19, 1
        // Predicated region
        $region13: #{tpu_custom_call.1} parent=11 // pred_check
          %p170 = pneg %p66
        $region14: #{tpu_custom_call.1} parent=11 // pred_check_branch
          %172 = sbr.rel (%p170) target = $region16
        $region15: #{tpu_custom_call.1} parent=11 // pred_region
          %174 = vsyncadd [#allocation6], 0
          %s175 = sshll.u32 %s1, 4
          %s176 = int_to_ptr.hbm [resolvable:$true] %s175
          %s177 = sshll.u32 [#allocation5], 4
          %s178 = int_to_ptr.vmem [resolvable:$true] %s177
          %183 = dma.hbm_to_vmem [thread:$0]  %s176, 256, %s178, [#allocation6], 128, 128, 8
        $region16: #{tpu_custom_call.1} parent=11 // pred_fallthru
          _
        // Predicated region
        $region17: #{tpu_custom_call.1} parent=11 // pred_check
          %p184 = pneg %p87
        $region18: #{tpu_custom_call.1} parent=11 // pred_check_branch
          %186 = sbr.rel (%p184) target = $region20
        $region19: #{tpu_custom_call.1} parent=11 // pred_region
          %188 = vsyncadd [#allocation6], 0
          %s189 = sshll.u32 %s2, 4
          %s190 = int_to_ptr.hbm [resolvable:$true] %s189
          %s191 = sshll.u32 [#allocation7], 4
          %s192 = int_to_ptr.vmem [resolvable:$true] %s191
          %197 = dma.hbm_to_vmem [thread:$0]  %s190, 1024, %s192, [#allocation6], 128, 128, 8
        $region20: #{tpu_custom_call.1} parent=11 // pred_fallthru
          _
        // Predicated region
        $region21: #{tpu_custom_call.1} parent=11 // pred_check
          %p198 = pneg %p108
        $region22: #{tpu_custom_call.1} parent=11 // pred_check_branch
          %200 = sbr.rel (%p198) target = $region24
        $region23: #{tpu_custom_call.1} parent=11 // pred_region
          %202 = vsyncadd [#allocation9], 0
          %s203 = sshll.u32 %s3, 4
          %s204 = int_to_ptr.hbm [resolvable:$true] %s203
          %s205 = sshll.u32 [#allocation8], 4
          %s206 = int_to_ptr.vmem [resolvable:$true] %s205
          %211 = dma.hbm_to_vmem [thread:$0]  %s204, 1024, %s206, [#allocation9], 128, 128, 8
        $region24: #{tpu_custom_call.1} parent=11 // pred_fallthru
          _
        // Predicated region
        $region25: #{tpu_custom_call.1} parent=11 // pred_check
          %p212 = pneg %p129
        $region26: #{tpu_custom_call.1} parent=11 // pred_check_branch
          %214 = sbr.rel (%p212) target = $region28
        $region27: #{tpu_custom_call.1} parent=11 // pred_region
          _
        $region28: #{tpu_custom_call.1} parent=11 // pred_fallthru
          _
      $region12: #{tpu_custom_call.1} parent=5 // pred_fallthru
        _
      %p215 = scmp.lt.s32.totalorder %s19, 2
      // Predicated region
      $region29: #{tpu_custom_call.1} parent=5 // pred_check
        %p216 = pneg %p215
      $region30: #{tpu_custom_call.1} parent=5 // pred_check_branch
        %218 = sbr.rel (%p216) target = $region32
      $region31: #{tpu_custom_call.1} parent=5 // pred_region
        // Predicated region
        $region33: #{tpu_custom_call.1} parent=31 // pred_check
          %p219 = pneg %p39
        $region34: #{tpu_custom_call.1} parent=31 // pred_check_branch
          %221 = sbr.rel (%p219) target = $region36
        $region35: #{tpu_custom_call.1} parent=31 // pred_region
          %s222 = sand.u32 %s29, 1
          %s223 = scalar_lea.sflag [#allocation3], %s222
          %s224 = sand.u32 %s29, 1
          %s225 = smul.addr %s224, 16
          %s226 = scalar_lea.vmem [#allocation2], %s225
          %228 = vsyncadd %s223, 0
          %s229 = smul.addr %s19, 2
          %s230 = smul.addr %s229, 8
          %s231 = scalar_lea.hbm %s0, %s230
          %s232 = sshll.u32 %s231, 4
          %s233 = int_to_ptr.hbm [resolvable:$true] %s232
          %s234 = sshll.u32 %s226, 4
          %s235 = int_to_ptr.vmem [resolvable:$true] %s234
          %240 = dma.hbm_to_vmem [thread:$0]  %s233, 256, %s235, %s223, 128, 128, 8
        $region36: #{tpu_custom_call.1} parent=31 // pred_fallthru
          _
      $region32: #{tpu_custom_call.1} parent=5 // pred_fallthru
        _
      %p241 = scmp.le.s32.totalorder 1, %s19
      %p242 = scmp.lt.s32.totalorder %s19, 3
      %p243 = pnand %p241, %p242
      %p244 = pneg %p243
      // Predicated region
      $region37: #{tpu_custom_call.1} parent=5 // pred_check
        _
      $region38: #{tpu_custom_call.1} parent=5 // pred_check_branch
        %246 = sbr.rel (%p243) target = $region40
      $region39: #{tpu_custom_call.1} parent=5 // pred_region
        %s247 = ssub.s32 %s19, 1
        %s248 = sand.u32 %s32, 1
        %s249 = scalar_lea.sflag [#allocation3], %s248
        %s250 = sand.u32 %s32, 1
        %s251 = smul.addr %s250, 16
        %s252 = scalar_lea.vmem [#allocation2], %s251
        // Predicated region
        $region41: #{tpu_custom_call.1} parent=39 // pred_check
          %p253 = pneg %p45
        $region42: #{tpu_custom_call.1} parent=39 // pred_check_branch
          %255 = sbr.rel (%p253) target = $region44
        $region43: #{tpu_custom_call.1} parent=39 // pred_region
          %257 = dma.done %s249, 256
        $region44: #{tpu_custom_call.1} parent=39 // pred_fallthru
          _
        // Predicated region
        $region45: #{tpu_custom_call.1} parent=39 // pred_check
          %p258 = pneg %p66
        $region46: #{tpu_custom_call.1} parent=39 // pred_check_branch
          %260 = sbr.rel (%p258) target = $region48
        $region47: #{tpu_custom_call.1} parent=39 // pred_region
          %262 = dma.done [#allocation6], 256
        $region48: #{tpu_custom_call.1} parent=39 // pred_fallthru
          _
        // Predicated region
        $region49: #{tpu_custom_call.1} parent=39 // pred_check
          %p263 = pneg %p87
        $region50: #{tpu_custom_call.1} parent=39 // pred_check_branch
          %265 = sbr.rel (%p263) target = $region52
        $region51: #{tpu_custom_call.1} parent=39 // pred_region
          %267 = dma.done [#allocation6], 1024
        $region52: #{tpu_custom_call.1} parent=39 // pred_fallthru
          _
        // Predicated region
        $region53: #{tpu_custom_call.1} parent=39 // pred_check
          %p268 = pneg %p108
        $region54: #{tpu_custom_call.1} parent=39 // pred_check_branch
          %270 = sbr.rel (%p268) target = $region56
        $region55: #{tpu_custom_call.1} parent=39 // pred_region
          %272 = dma.done [#allocation9], 1024
        $region56: #{tpu_custom_call.1} parent=39 // pred_fallthru
          _
        %s273 = sand.u32 %s32, 1
        %s274 = scalar_lea.sflag [#allocation3], %s273
        %s275 = sand.u32 %s32, 1
        %s276 = smul.addr %s275, 16
        %s277 = scalar_lea.vmem [#allocation2], %s276
        %p278 = pneg %p45
        %p279 = pneg %p42
        %p280 = pneg %p66
        %p281 = pneg %p63
        %p282 = pneg %p87
        %p283 = pneg %p84
        %p284 = pneg %p108
        %p285 = pneg %p105
        %p286 = pneg %p129
        %p287 = pneg %p126
        %p288 = pneg %p155
        %p289 = pneg %p152
        %s290 = sand.u32 %s142, 1
        %s291 = scalar_lea.sflag [#allocation4], %s290
        %s292 = sand.u32 %s142, 1
        %s293 = smul.addr %s292, 16
        %s294 = scalar_lea.vmem [#allocation10], %s293
        %v295 = vld [vmem:[%s252] sm:$0xff]
        %v296 = vld [vmem:[%s252 + $0x8] sm:$0xff]
        %v297 = vld [vmem:[#allocation5] sm:$0xff]
        %v298 = vld [vmem:[#allocation5 + $0x8] sm:$0xff]
        %vm299 = vcmask 130048
        %v301 = vsel %vm299, %v297, 0
        %v304 = vsel %vm299, %v298, 0
        %306 = vmatpush.msra.mxu0 0.0
        %307 = vmatpush.msra.mxu0 0.0
        %308 = vmatpush.msra.mxu0 0.0
        %309 = vmatpush.msra.mxu0 0.0
        %310 = vmatpush.msra.mxu0 0.0
        %311 = vmatpush.msra.mxu0 0.0
        %312 = vmatpush.msra.mxu0 0.0
        %313 = vmatpush.msra.mxu0 0.0
        %314 = vmatpush.msra.mxu0 0.0
        %315 = vmatpush.msra.mxu0 0.0
        %316 = vmatpush.msra.mxu0 0.0
        %317 = vmatpush.msra.mxu0 0.0
        %318 = vmatpush.msra.mxu0 0.0
        %319 = vmatpush.msra.mxu0 0.0
        %320 = vmatpush.msra.mxu0 %v296
        %321 = vmatpush.msra.mxu0 %v295
        %322 = vmatmul.f32.gmra.mxu0 %v301
        %v323 = vpop.f32.mrf.mxu0
        %v324 = vadd.f32 0.0, %v323
        %325 = vmatmul.f32.gmra.mxu0 %v304
        %v326 = vpop.f32.mrf.mxu0
        %v327 = vadd.f32 0.0, %v326
        %328 = vdwg.mxu0
        %v329 = vld [vmem:[#allocation7] sm:$0xff]
        %v330 = vld [vmem:[#allocation7 + $0x8] sm:$0xff]
        %v331 = vld [vmem:[#allocation7 + $0x10] sm:$0xff]
        %v332 = vld [vmem:[#allocation7 + $0x18] sm:$0xff]
        %v333 = vld [vmem:[#allocation7 + $0x20] sm:$0xff]
        %v334 = vld [vmem:[#allocation7 + $0x28] sm:$0xff]
        %v335 = vld [vmem:[#allocation7 + $0x30] sm:$0xff]
        %v336 = vld [vmem:[#allocation7 + $0x38] sm:$0xff]
        %v337 = vld [vmem:[#allocation8] sm:$0xff]
        %v338 = vld [vmem:[#allocation8 + $0x8] sm:$0xff]
        %v339 = vld [vmem:[#allocation8 + $0x10] sm:$0xff]
        %v340 = vld [vmem:[#allocation8 + $0x18] sm:$0xff]
        %v341 = vld [vmem:[#allocation8 + $0x20] sm:$0xff]
        %v342 = vld [vmem:[#allocation8 + $0x28] sm:$0xff]
        %v343 = vld [vmem:[#allocation8 + $0x30] sm:$0xff]
        %v344 = vld [vmem:[#allocation8 + $0x38] sm:$0xff]
        %vm345 = vcmask 523264
        %v347 = vsel %vm345, %v295, 0
        %v350 = vsel %vm345, %v296, 0
        %352 = vmatpush.msra.mxu0 0.0
        %353 = vmatpush.msra.mxu0 0.0
        %354 = vmatpush.msra.mxu0 0.0
        %355 = vmatpush.msra.mxu0 0.0
        %356 = vmatpush.msra.mxu0 0.0
        %357 = vmatpush.msra.mxu0 0.0
        %358 = vmatpush.msra.mxu0 0.0
        %359 = vmatpush.msra.mxu0 0.0
        %360 = vmatpush.msra.mxu0 %v344
        %361 = vmatpush.msra.mxu0 %v343
        %362 = vmatpush.msra.mxu0 %v342
        %363 = vmatpush.msra.mxu0 %v341
        %364 = vmatpush.msra.mxu0 %v340
        %365 = vmatpush.msra.mxu0 %v339
        %366 = vmatpush.msra.mxu0 %v338
        %367 = vmatpush.msra.mxu0 %v337
        %368 = vmatmul.f32.gmra.mxu0 %v347
        %v369 = vpop.f32.mrf.mxu0
        %v370 = vadd.f32 0.0, %v369
        %371 = vmatmul.f32.gmra.mxu0 %v350
        %v372 = vpop.f32.mrf.mxu0
        %v373 = vadd.f32 0.0, %v372
        %374 = vdwg.mxu0
        %v376 = vsel %vm345, %v324, 0
        %v379 = vsel %vm345, %v327, 0
        %381 = vmatpush.msra.mxu0 0.0
        %382 = vmatpush.msra.mxu0 0.0
        %383 = vmatpush.msra.mxu0 0.0
        %384 = vmatpush.msra.mxu0 0.0
        %385 = vmatpush.msra.mxu0 0.0
        %386 = vmatpush.msra.mxu0 0.0
        %387 = vmatpush.msra.mxu0 0.0
        %388 = vmatpush.msra.mxu0 0.0
        %389 = vmatpush.msra.mxu0 %v336
        %390 = vmatpush.msra.mxu0 %v335
        %391 = vmatpush.msra.mxu0 %v334
        %392 = vmatpush.msra.mxu0 %v333
        %393 = vmatpush.msra.mxu0 %v332
        %394 = vmatpush.msra.mxu0 %v331
        %395 = vmatpush.msra.mxu0 %v330
        %396 = vmatpush.msra.mxu0 %v329
        %397 = vmatmul.f32.gmra.mxu0 %v376
        %v398 = vpop.f32.mrf.mxu0
        %v399 = vadd.f32 %v370, %v398
        %400 = vmatmul.f32.gmra.mxu0 %v379
        %v401 = vpop.f32.mrf.mxu0
        %v402 = vadd.f32 %v373, %v401
        %403 = vdwg.mxu0
        %v404 = vld [vmem:[%s4] sm:$0x1]
        %v406 = vperm.slane %v404, 0
        %v408 = vadd.f32 %v399, %v406
        %v409 = vadd.f32 %v402, %v406
        %v410 = vmax.f32 %v408, 0.0
        %v411 = vmax.f32 %v409, 0.0
        %412 = vst [vmem:[%s294] sm:$0xff] %v410
        %413 = vst [vmem:[%s294 + $0x8] sm:$0xff] %v411
        %s414 = sand.u32 %s142, 1
        %s415 = scalar_lea.sflag [#allocation4], %s414
        %s416 = sand.u32 %s142, 1
        %s417 = smul.addr %s416, 16
        %s418 = scalar_lea.vmem [#allocation10], %s417
        // Predicated region
        $region57: #{tpu_custom_call.1} parent=39 // pred_check
          %p419 = pneg %p152
        $region58: #{tpu_custom_call.1} parent=39 // pred_check_branch
          %421 = sbr.rel (%p419) target = $region60
        $region59: #{tpu_custom_call.1} parent=39 // pred_region
          %423 = vsyncadd %s415, 0
          %s424 = smul.addr %s24, 2
          %s425 = smul.addr %s424, 8
          %s426 = scalar_lea.hbm %s5, %s425
          %s427 = sshll.u32 %s418, 4
          %s428 = int_to_ptr.vmem [resolvable:$true] %s427
          %s429 = sshll.u32 %s426, 4
          %s430 = int_to_ptr.hbm [resolvable:$true] %s429
          %435 = dma.vmem_to_hbm [thread:$0]  %s428, 256, %s430, %s415, 128, 128, 8
        $region60: #{tpu_custom_call.1} parent=39 // pred_fallthru
          _
      $region40: #{tpu_custom_call.1} parent=5 // pred_fallthru
        _
      %p436 = scmp.le.s32.totalorder 2, %s19
      // Predicated region
      $region61: #{tpu_custom_call.1} parent=5 // pred_check
        %p437 = pneg %p436
      $region62: #{tpu_custom_call.1} parent=5 // pred_check_branch
        %439 = sbr.rel (%p437) target = $region64
      $region63: #{tpu_custom_call.1} parent=5 // pred_region
        %s440 = ssub.s32 %s19, 2
        // Predicated region
        $region65: #{tpu_custom_call.1} parent=63 // pred_check
          %p441 = pneg %p158
        $region66: #{tpu_custom_call.1} parent=63 // pred_check_branch
          %443 = sbr.rel (%p441) target = $region68
        $region67: #{tpu_custom_call.1} parent=63 // pred_region
          %s444 = sand.u32 %s143, 1
          %s445 = scalar_lea.sflag [#allocation4], %s444
          %s446 = sand.u32 %s143, 1
          %s447 = smul.addr %s446, 16
          %s448 = scalar_lea.vmem [#allocation10], %s447
          %450 = dma.done %s445, 256
        $region68: #{tpu_custom_call.1} parent=63 // pred_fallthru
          _
      $region64: #{tpu_custom_call.1} parent=5 // pred_fallthru
        _
    $region6: #{tpu_custom_call.1} parent=1 // loop_footer
      %s23 = sadd.s32 1, %s19
    $region7: #{tpu_custom_call.1} parent=1 // loop_footer_branch
      %18 = sbr.rel target = $region3
    $region8: #{tpu_custom_call.1} parent=1 // loop_exit
      _
    %451 = vsyncpa [#allocation3], 1
    %s452 = scalar_lea.sflag [#allocation3], 1
    %453 = vsyncpa %s452, 1
    %454 = vsyncpa [#allocation6], 1
    %455 = vsyncpa [#allocation9], 1
    %456 = vsyncpa [#allocation4], 1
    %s457 = scalar_lea.sflag [#allocation4], 1
    %458 = vsyncpa %s457, 1

</llo_original>
